<compile_context>
chip_gen: v6e
topology: v6e:2x2x1
jax: 0.10.0
libtpu: 0.0.40
codegen_flags: <defaults>
</compile_context>

<pallas_src>
import jax
import jax.numpy as jnp
from jax.experimental import pallas as pl
from jax.experimental.pallas import tpu as pltpu

_MIB = 1024 * 1024


def _self_attention_emb_kernel(x_ref, w_ref, o_ref):
    """Simple path: full (L, H) per batch tile. x:(TB,L,H), w:(1,H), o:(TB,L)."""
    x = x_ref[...]
    w = w_ref[...]
    # Multiply in the native dtype (bf16 VALU on v6e/v7x); reduce in f32. The cast
    # rides the per-vreg compute stream -- no whole-tile f32 copy is materialized.
    prod = x * w                                   # (1,H) broadcasts over (TB,L,H)
    if prod.dtype != jnp.float32:
        prod = prod.astype(jnp.float32)
    s = jnp.tanh(jnp.sum(prod, axis=-1))           # (TB, L) f32: VPU mul + XLU reduce
    # Numerically stable softmax over the seq (last / lane) axis.
    m = jnp.max(s, axis=-1, keepdims=True)
    e = jnp.exp(s - m)
    denom = jnp.sum(e, axis=-1, keepdims=True)
    o_ref[...] = (e / denom).astype(o_ref.dtype)   # exact normalize (HBM-bound anyway)


def _self_attention_emb_htiled_kernel(x_ref, w_ref, o_ref, acc_ref):
    """Fallback path: reduction grid axis over H.
    x:(TB,L,TH), w:(1,TH), o:(TB,L), acc:(TB,L) f32 scratch persisting across H."""
    k = pl.program_id(1)

    @pl.when(k == 0)
    def _():
        acc_ref[...] = jnp.zeros_like(acc_ref)

    prod = x_ref[...] * w_ref[...]
    if prod.dtype != jnp.float32:
        prod = prod.astype(jnp.float32)
    acc_ref[...] += jnp.sum(prod, axis=-1)

    @pl.when(k == pl.num_programs(1) - 1)
    def _():
        s = jnp.tanh(acc_ref[...])
        m = jnp.max(s, axis=-1, keepdims=True)
        e = jnp.exp(s - m)
        denom = jnp.sum(e, axis=-1, keepdims=True)
        o_ref[...] = (e / denom).astype(o_ref.dtype)


def _vmem_capacity_bytes():
    """Per-core VMEM capacity; conservative (v7x-sized) fallback if unavailable."""
    try:
        cap = getattr(pltpu.get_tpu_info(), "vmem_capacity_bytes", None)
        if cap:
            return int(cap)
    except Exception:
        pass
    return 64 * _MIB


def _prefer_even_batch_grid(B, block_b, sublane_align, total_bytes):
    """Nudge the batch tiling so cdiv(B, block_b) is even -> both v7x TensorCores get
    work through dimension_semantics='parallel'. Skipped for tiny inputs; harmless
    no-op on single-TC v5e/v6e. Preserves block_b's legality (aligned or full B)."""
    grid_b = pl.cdiv(B, block_b)
    if total_bytes < 2 * _MIB:                     # not worth splitting
        return block_b, grid_b
    if grid_b == 1 and B > 1:
        half = pl.cdiv(pl.cdiv(B, 2), sublane_align) * sublane_align
        if 0 < half < B:
            return half, pl.cdiv(B, half)
        return block_b, grid_b
    if grid_b % 2 == 1 and block_b < B:
        bb = block_b
        while bb > sublane_align and pl.cdiv(B, bb) % 2 == 1:
            bb -= sublane_align
        if pl.cdiv(B, bb) % 2 == 0:
            return bb, pl.cdiv(B, bb)
    return block_b, grid_b


def self_attention_emb(inputs, attention_weights, *, block_b=None, block_h=None,
                       vmem_limit_bytes=None):
    """inputs: [B, L, H], attention_weights: [H] -> softmax scores [B, L]."""
    B, L, H = inputs.shape
    itemsize = inputs.dtype.itemsize
    w2d = attention_weights.reshape(1, H)          # 2-D for TPU tiling

    # ---- generation-aware budgets -------------------------------------------
    vmem_cap = _vmem_capacity_bytes()
    # ~10.7 MiB/buffer on v7x (64 MiB VMEM), 16 MiB on v5e/v6e (128 MiB). The input
    # stream double-buffers 2x this and stays well under the scoped limit below.
    target_bytes = min(16 * _MIB, max(vmem_cap // 6, 2 * _MIB))
    if vmem_limit_bytes is None:
        vmem_limit_bytes = min(64 * _MIB, vmem_cap // 2)

    row_bytes = L * H * itemsize
    total_bytes = B * row_bytes
    # The (block_b, L) output block needs block_b % sublane_align == 0 or block_b == B.
    sublane_align = max(8, 32 // max(itemsize, 1))  # f32: 8, bf16: 16, int8/fp8: 32

    cost = pl.CostEstimate(
        flops=2 * B * L * H + 4 * B * L,
        transcendentals=2 * B * L,                  # tanh + exp
        bytes_accessed=total_bytes + H * itemsize + B * L * itemsize,
    )
    compiler_common = dict(vmem_limit_bytes=vmem_limit_bytes)

    def legal_block_b(bb):
        bb = max(1, min(B, int(bb)))
        if bb >= B or B < sublane_align:
            return B if bb >= B or B < sublane_align else bb
        return max(sublane_align, (bb // sublane_align) * sublane_align)

    # ---- choose path ---------------------------------------------------------
    simple_fits = (total_bytes <= target_bytes or
                   (B >= sublane_align and sublane_align * row_bytes <= target_bytes))
    if block_h is not None and block_h < H:
        h_tiled = True
    elif block_h is None and not simple_fits and H % 128 == 0:
        h_tiled = True
    else:
        h_tiled = False
        # TODO(synk): rows too large for the tile budget with H not a multiple of 128
        # would need H padding or an L-tiled online softmax; they fall through to the
        # simple path (one oversized row slab per step) below.

    if h_tiled:
        if block_h is None:
            bb_min = B if B < sublane_align else sublane_align
            cols = max(128, (target_bytes // max(bb_min * L * itemsize, 1)) // 128 * 128)
            block_h = min(H, cols)
            while H % block_h != 0:                 # H % 128 == 0 here -> stops by 128
                block_h -= 128
        elif block_h != H and (block_h % 128 != 0 or H % block_h != 0):
            raise ValueError("block_h must be a multiple of 128 that divides H")
        if block_b is None:
            block_b = legal_block_b(target_bytes // max(L * block_h * itemsize, 1))
        else:
            block_b = legal_block_b(block_b)
        block_b, grid_b = _prefer_even_batch_grid(B, block_b, sublane_align, total_bytes)
        grid_h = H // block_h
        return pl.pallas_call(
            _self_attention_emb_htiled_kernel,
            out_shape=jax.ShapeDtypeStruct((B, L), inputs.dtype),
            grid=(grid_b, grid_h),
            in_specs=[
                pl.BlockSpec((block_b, L, block_h), lambda i, k: (i, 0, k)),
                pl.BlockSpec((1, block_h), lambda i, k: (0, k)),
            ],
            out_specs=pl.BlockSpec((block_b, L), lambda i, k: (i, 0)),
            scratch_shapes=[pltpu.VMEM((block_b, L), jnp.float32)],
            compiler_params=pltpu.CompilerParams(
                dimension_semantics=("parallel", "arbitrary"), **compiler_common),
            cost_estimate=cost,
        )(inputs, w2d)

    # Simple path: full (L, H) per batch tile, so the seq-softmax never crosses blocks.
    if block_b is None:
        if total_bytes <= target_bytes:
            block_b = B
        else:
            block_b = legal_block_b(target_bytes // max(row_bytes, 1))
    else:
        block_b = legal_block_b(block_b)
    block_b, grid_b = _prefer_even_batch_grid(B, block_b, sublane_align, total_bytes)
    return pl.pallas_call(
        _self_attention_emb_kernel,
        out_shape=jax.ShapeDtypeStruct((B, L), inputs.dtype),
        grid=(grid_b,),
        in_specs=[
            pl.BlockSpec((block_b, L, H), lambda i: (i, 0, 0)),
            pl.BlockSpec((1, H), lambda i: (0, 0)),
        ],
        out_specs=pl.BlockSpec((block_b, L), lambda i: (i, 0)),
        compiler_params=pltpu.CompilerParams(
            dimension_semantics=("parallel",), **compiler_common),
        cost_estimate=cost,
    )(inputs, w2d)


if __name__ == "__main__":
    # Small shapes consistent with the module: batch=2, seq=8, hidden(=attention_size)=32
    B, L, H = 2, 8, 32
    key = jax.random.PRNGKey(0)
    k_x, k_w = jax.random.split(key)

    inputs = jax.random.normal(k_x, (B, L, H), dtype=jnp.float32)
    # nn.init.uniform(w, -0.005, 0.005) equivalent, deterministic.
    attention_weights = jax.random.uniform(
        k_w, (H,), dtype=jnp.float32, minval=-0.005, maxval=0.005)

    out = jax.block_until_ready(self_attention_emb(inputs, attention_weights))
    ref = jax.nn.softmax(jnp.tanh(inputs @ attention_weights), axis=-1)
    assert out.shape == (B, L)
    assert jnp.allclose(out, ref, atol=1e-6, rtol=1e-5), "simple path mismatch"

    # Also exercise the H-tiled fallback (reduction grid axis + scratch accumulator
    # with pl.when init/finalize) at a small shape by forcing block_h < H.
    H2 = 256
    x2 = jax.random.normal(k_x, (B, L, H2), dtype=jnp.float32)
    w2 = jax.random.uniform(k_w, (H2,), dtype=jnp.float32, minval=-0.005, maxval=0.005)
    out2 = jax.block_until_ready(self_attention_emb(x2, w2, block_h=128))
    ref2 = jax.nn.softmax(jnp.tanh(x2 @ w2), axis=-1)
    assert out2.shape == (B, L)
    assert jnp.allclose(out2, ref2, atol=1e-6, rtol=1e-5), "H-tiled path mismatch"

    print("KERNEL_OK")
</pallas_src>

<mosaic_0001>
module attributes {stable_mosaic.version = 11 : i64} {
  func.func @_self_attention_emb_kernel(%arg0: i32, %arg1: memref<2x8x32xf32, #tpu.memory_space<vmem>>, %arg2: memref<1x32xf32, #tpu.memory_space<vmem>>, %arg3: memref<2x8xf32, #tpu.memory_space<vmem>>) attributes {dimension_semantics = [#tpu.dimension_semantics<parallel>], iteration_bounds = array<i64: 1>, scalar_prefetch = 0 : i64, scratch_operands = 0 : i64, tpu.core_type = #tpu.core_type<tc>, window_params = [{transform_indices = @transform_0, window_bounds = array<i64: 2, 8, 32>}, {pipeline_mode = #tpu.pipeline_mode<synchronous>, transform_indices = @transform_1, window_bounds = array<i64: 1, 32>}, {transform_indices = @transform_2, window_bounds = array<i64: 2, 8>}]} {
    %c0 = arith.constant 0 : index
    %c0_0 = arith.constant 0 : index
    %c0_1 = arith.constant 0 : index
    %0 = vector.load %arg1[%c0, %c0_0, %c0_1] : memref<2x8x32xf32, #tpu.memory_space<vmem>>, vector<2x8x32xf32>
    %c0_2 = arith.constant 0 : index
    %c0_3 = arith.constant 0 : index
    %1 = vector.load %arg2[%c0_2, %c0_3] : memref<1x32xf32, #tpu.memory_space<vmem>>, vector<1x32xf32>
    %2 = vector.shape_cast %1 : vector<1x32xf32> to vector<1x1x32xf32>
    %3 = vector.broadcast %2 : vector<1x1x32xf32> to vector<2x8x32xf32>
    %4 = arith.mulf %0, %3 : vector<2x8x32xf32>
    %cst = arith.constant dense<0.000000e+00> : vector<2x8xf32>
    %5 = vector.multi_reduction <add>, %4, %cst [2] : vector<2x8x32xf32> to vector<2x8xf32>
    %6 = math.tanh %5 : vector<2x8xf32>
    %cst_4 = arith.constant dense<0xFF800000> : vector<2xf32>
    %7 = vector.multi_reduction <maximumf>, %6, %cst_4 [1] : vector<2x8xf32> to vector<2xf32>
    %8 = vector.shape_cast %7 : vector<2xf32> to vector<2x1xf32>
    %9 = vector.broadcast %8 : vector<2x1xf32> to vector<2x8xf32>
    %10 = arith.subf %6, %9 : vector<2x8xf32>
    %11 = math.exp %10 : vector<2x8xf32>
    %cst_5 = arith.constant dense<0.000000e+00> : vector<2xf32>
    %12 = vector.multi_reduction <add>, %11, %cst_5 [1] : vector<2x8xf32> to vector<2xf32>
    %13 = vector.shape_cast %12 : vector<2xf32> to vector<2x1xf32>
    %14 = vector.broadcast %13 : vector<2x1xf32> to vector<2x8xf32>
    %15 = arith.divf %11, %14 : vector<2x8xf32>
    %c0_6 = arith.constant 0 : index
    %c0_7 = arith.constant 0 : index
    %16 = vector.load %arg3[%c0_6, %c0_7] : memref<2x8xf32, #tpu.memory_space<vmem>>, vector<2x8xf32>
    tpu.vector_store %arg3[%c0_6, %c0_7], %15 {strides = array<i32>} : memref<2x8xf32, #tpu.memory_space<vmem>>, vector<2x8xf32>,
    return
  }
  func.func @transform_0(%arg0: i32) -> (i32, i32, i32) {
    %c0_i32 = arith.constant 0 : i32
    %c0_i32_0 = arith.constant 0 : i32
    %c0_i32_1 = arith.constant 0 : i32
    return %arg0, %c0_i32, %c0_i32_0 : i32, i32, i32
  }
  func.func @transform_1(%arg0: i32) -> (i32, i32) {
    %c0_i32 = arith.constant 0 : i32
    %c0_i32_0 = arith.constant 0 : i32
    %c0_i32_1 = arith.constant 0 : i32
    return %c0_i32, %c0_i32_0 : i32, i32
  }
  func.func @transform_2(%arg0: i32) -> (i32, i32) {
    %c0_i32 = arith.constant 0 : i32
    %c0_i32_0 = arith.constant 0 : i32
    return %arg0, %c0_i32 : i32, i32
  }
}

</mosaic_0001>

<llo_original>
// kernel: tpu_custom_call.1
$region0: #{tpu_custom_call.1}
  #allocation0 [shape = 'u32[]', space=smem, size = 0x4, offset = 0x4, fixed_abs, tag = 'smem constant byte address 0x4 - core index']
  #allocation1 [shape = 'u32[144,128]{1,0:T(1,128)}', space=vmem, size = 0x12000, scoped, tag = 'internal scratch']
  %s0 = inlined_call_operand.hbm [shape: f32[2,8,32], index: 0, kind: input, shape index: {}]
  %s1 = inlined_call_operand.vmem [shape: f32[1,32], index: 1, kind: input, shape index: {}]
  %s2 = inlined_call_operand.hbm [shape: f32[2,8], index: 2, kind: output, shape index: {}]
  %s3 = sld [smem:[#allocation0]]
  $region22: #{tpu_custom_call.1} parent=0
    _
  %s5 = ssub.s32 1, %s3
  %s6 = scalar_select 0, %s5, %s3
  $region1: #{tpu_custom_call.1} parent=0
    #allocation2 [shape = 'u8[8192]{0}', space=vmem, size = 0x2000, scoped, tag = 'input window, operand 0, single buffered']
    #allocation3 [shape = 's32[1]{0}', space=sflag, size = 0x4, scoped, tag = 'scoped memory for tpu_custom_call.1']
    #allocation4 [shape = 's32[1]{0}', space=sflag, size = 0x4, scoped, tag = 'scoped memory for tpu_custom_call.1']
    #allocation5 [shape = 'u8[1024]{0}', space=vmem, size = 0x400, scoped, tag = 'output window, operand 0, single buffered']
    %7 = vsyncpa [#allocation3], 0
    %8 = vsyncpa [#allocation4], 0
    // Predicated region
    $region2: #{tpu_custom_call.1} parent=1 // pred_check
      _
    $region3: #{tpu_custom_call.1} parent=1 // pred_check_branch
      %10 = sbr.rel (0) target = $region5
    $region4: #{tpu_custom_call.1} parent=1 // pred_region
      %s12 = ssub.s32 256, 256
      %13 = vsyncadd [#allocation3], %s12
      %s14 = sshll.u32 [#allocation2], 4
      %s15 = int_to_ptr.vmem [resolvable:$true] %s14
      %20 = dma.hbm_to_vmem [thread:$0]  %s0, 256, %s15, [#allocation3], 128, 128, 8
    $region5: #{tpu_custom_call.1} parent=1 // pred_fallthru
      _
    // Predicated region
    $region6: #{tpu_custom_call.1} parent=1 // pred_check
      _
    $region7: #{tpu_custom_call.1} parent=1 // pred_check_branch
      %22 = sbr.rel (0) target = $region9
    $region8: #{tpu_custom_call.1} parent=1 // pred_region
      _
    $region9: #{tpu_custom_call.1} parent=1 // pred_fallthru
      _
    // Predicated region
    $region10: #{tpu_custom_call.1} parent=1 // pred_check
      _
    $region11: #{tpu_custom_call.1} parent=1 // pred_check_branch
      %24 = sbr.rel (0) target = $region13
    $region12: #{tpu_custom_call.1} parent=1 // pred_region
      %25 = dma.done [#allocation3], 256
    $region13: #{tpu_custom_call.1} parent=1 // pred_fallthru
      _
    %v26 = vld [vmem:[#allocation2] sm:$0xff]
    %v27 = vld [vmem:[#allocation2 + $0x8] sm:$0xff]
    %v28 = vld [vmem:[%s1] sm:$0x1]
    %v30 = vlaneseq
    %v31 = vshrl.u32 %v30, 7
    %v32 = vsub.s32 0, %v31
    %v33 = vrot.slane %v28, %v32
    %v35 = vmul.f32 %v26, %v33
    %v36 = vmul.f32 %v27, %v33
    %vm37 = vcmask 261120
    %v38 = vsel %vm37, %v35, 0.0
    %39 = vadd.xlane.f32.xlu0 %v38
    %v40 = vpop.xlane.xlu0 %39
    %v41 = vsel %vm37, %v36, 0.0
    %42 = vadd.xlane.f32.xlu0 %v41
    %v43 = vpop.xlane.xlu0 %42
    %v44 = vtanh.pop %v40
    %v45 = vtanh.pop %v43
    %v48 = vlaneseq
    %v49 = vand.u32 %v48, 127
    %v50 = vlaneseq
    %v51 = vshrl.u32 %v50, 7
    %v52 = vsub.s32 %v49, %v51
    %v53 = vrot.slane %v44, %v52
    %v54 = vlaneseq
    %v55 = vshrl.u32 %v54, 7
    %v56 = vsub.s32 %v49, %v55
    %v57 = vrot.slane %v45, %v56
    %vm58 = vcmask 1041409
    %v59 = vsel %vm58, %v57, %v53
    %vm61 = vcmask 58368
    %v62 = vsel %vm61, %v59, -inf
    %63 = vmax.xlane.f32.xlu0 %v62
    %v64 = vpop.xlane.xlu0 %63
    %v66 = vlaneseq
    %v67 = vshrl.u32 %v66, 7
    %v68 = vsub.s32 0, %v67
    %v69 = vrot.slane %v64, %v68
    %v70 = vlaneseq
    %v71 = vshrl.u32 %v70, 7
    %v72 = vsub.s32 1, %v71
    %v73 = vrot.slane %v64, %v72
    %v76 = vsub.f32 %v44, %v69
    %v77 = vsub.f32 %v45, %v73
    %v78 = vmul.f32 %v76, 1.442695
    %v79 = vpow.pop %v78
    %v80 = vmul.f32 %v77, 1.442695
    %v81 = vpow.pop %v80
    %84 = vset.pattern.permute.xlu0 0
    %85 = vperm.xlu0 %84, %v79
    %v86 = vpop.permute.xlu0 %85
    %87 = vset.pattern.permute.xlu0 0
    %88 = vperm.xlu0 %87, %v81
    %v89 = vpop.permute.xlu0 %88
    %v90 = vlaneseq
    %v91 = vshrl.u32 %v90, 7
    %v92 = vsub.s32 %v49, %v91
    %v93 = vrot.slane %v86, %v92
    %v94 = vlaneseq
    %v95 = vshrl.u32 %v94, 7
    %v96 = vsub.s32 %v49, %v95
    %v97 = vrot.slane %v89, %v96
    %v98 = vsel %vm58, %v97, %v93
    %v100 = vsel %vm61, %v98, 0.0
    %101 = vadd.xlane.f32.xlu0 %v100
    %v102 = vpop.xlane.xlu0 %101
    %v104 = vlaneseq
    %v105 = vshrl.u32 %v104, 7
    %v106 = vsub.s32 0, %v105
    %v107 = vrot.slane %v102, %v106
    %v108 = vlaneseq
    %v109 = vshrl.u32 %v108, 7
    %v110 = vsub.s32 1, %v109
    %v111 = vrot.slane %v102, %v110
    %v114 = vrcp.pop %v107
    %v115 = vmul.f32 %v79, %v114
    %v116 = vrcp.pop %v111
    %v117 = vmul.f32 %v81, %v116
    %120 = vset.pattern.permute.xlu0 0
    %121 = vperm.xlu0 %120, %v115
    %v122 = vpop.permute.xlu0 %121
    %123 = vset.pattern.permute.xlu0 0
    %124 = vperm.xlu0 %123, %v117
    %v125 = vpop.permute.xlu0 %124
    %v126 = vlaneseq
    %v127 = vshrl.u32 %v126, 7
    %v128 = vsub.s32 %v49, %v127
    %v129 = vrot.slane %v122, %v128
    %v130 = vlaneseq
    %v131 = vshrl.u32 %v130, 7
    %v132 = vsub.s32 %v49, %v131
    %v133 = vrot.slane %v125, %v132
    %v134 = vsel %vm58, %v133, %v129
    %136 = vst.msk [vmem:[#allocation5] sm:$0x3] %vm61, %v134
    // Predicated region
    $region14: #{tpu_custom_call.1} parent=1 // pred_check
      _
    $region15: #{tpu_custom_call.1} parent=1 // pred_check_branch
      %138 = sbr.rel (0) target = $region17
    $region16: #{tpu_custom_call.1} parent=1 // pred_region
      %s140 = ssub.s32 32, 32
      %141 = vsyncadd [#allocation4], %s140
      %s143 = sshll.u32 [#allocation5], 4
      %s144 = int_to_ptr.vmem [resolvable:$true] %s143
      %146 = dma.vmem_to_hbm [thread:$0]  %s144, 32, %s2, [#allocation4]
    $region17: #{tpu_custom_call.1} parent=1 // pred_fallthru
      _
    // Predicated region
    $region18: #{tpu_custom_call.1} parent=1 // pred_check
      _
    $region19: #{tpu_custom_call.1} parent=1 // pred_check_branch
      %148 = sbr.rel (0) target = $region21
    $region20: #{tpu_custom_call.1} parent=1 // pred_region
      %149 = dma.done [#allocation4], 32
    $region21: #{tpu_custom_call.1} parent=1 // pred_fallthru
      _
    %150 = vsyncpa [#allocation3], 1
    %151 = vsyncpa [#allocation4], 1

</llo_original>
